<compile_context>
chip_gen: v5e
topology: v5e:2x2
jax: 0.10.0
libtpu: 0.0.40
codegen_flags: <defaults>
</compile_context>

<pallas_src>
import numpy as np
import jax
import jax.numpy as jnp
from jax.experimental import pallas as pl
from jax.experimental.pallas import tpu as pltpu

LANE = 128  # TPU lane width: pad feature dims to this for lane-dense layout


# ----------------------------------------------------------------------------
# Mask construction — exact port of MADE._build_masks (Eq. 12/13).
# Masks are returned in [in_features, out_features] layout (kernel computes
# x @ W with W already transposed w.r.t. PyTorch nn.Linear).
# ----------------------------------------------------------------------------
def build_made_masks(num_input, num_output, num_hidden, num_layers=3):
    rng = np.random.RandomState(0)
    m = [np.arange(1, num_input + 1)]
    masks = []
    for i in range(1, num_layers + 1):
        if i == num_layers:
            mm = np.arange(1, num_input + 1)
            assert num_output % num_input == 0, "num_output must be multiple of num_input"
            m.append(np.hstack([mm for _ in range(num_output // num_input)]))
            mask = m[i][None, :] > m[i - 1][:, None]   # (in, out), strict
        else:
            m.append(rng.randint(1, num_input, size=num_hidden))
            mask = m[i][None, :] >= m[i - 1][:, None]  # (in, out)
        masks.append(mask.astype(np.float32))
    # Meaningful autoregressive connectivity check (the original torch check
    # `np.triu(final).all() == 0` is trivially true). With rows = inputs and
    # cols = outputs, output i may only depend on inputs j < i, so the
    # diagonal and the lower triangle of the connectivity product must be 0.
    prev = masks[0]
    for i in range(1, len(masks)):
        prev = prev @ masks[i]
    for sub in np.split(prev, num_output // num_input, axis=1):
        assert not np.tril(sub).any(), "mask connectivity is not autoregressive"
    return masks


# ----------------------------------------------------------------------------
# Pallas kernel: full IAF forward on padded, lane-dense operands.
#   xc   : [TILE_B, 128]   lanes [0:I)=x, [I:I+C)=ctx, rest 0
#   w0   : [128, 128]      rows [0:I)=mask0*W0, [I:I+C)=Wc, cols [0:H) real
#   w1   : [128, 128]      [0:H, 0:H) = mask1*W1
#   w2   : [128, 256]      cols [0:I)=m-half of mask2*W2, [128:128+I)=s-half
#   b*   : [1, width]      zero-padded; b2 s-half has sigmoid_arg_bias folded in
# Outputs:
#   z    : [TILE_B, 128]   real values in lanes [0:I)
#   nls  : [TILE_B, 128]   -log_sigmoid(s), real values in lanes [0:I)
# ----------------------------------------------------------------------------
def iaf_kernel(xc_ref, w0_ref, b0_ref, w1_ref, b1_ref, w2_ref, b2_ref,
               z_ref, nls_ref):
    xc = xc_ref[...]

    # Layer 0: masked linear + context linear fused into one matmul
    h0 = jnp.dot(xc, w0_ref[...], preferred_element_type=jnp.float32) + b0_ref[...]
    h0 = jnp.maximum(h0, 0.0)

    # Layer 1: masked linear
    h1 = jnp.dot(h0, w1_ref[...], preferred_element_type=jnp.float32) + b1_ref[...]
    h1 = jnp.maximum(h1, 0.0)

    # Layer 2: masked linear; m in lanes [0:128), s in lanes [128:256)
    out = jnp.dot(h1, w2_ref[...], preferred_element_type=jnp.float32) + b2_ref[...]
    m = out[:, :LANE]
    s = out[:, LANE:]          # sigmoid_arg_bias already folded into bias

    # LSTM-type update (Eq. 11-14)
    sig = 1.0 / (1.0 + jnp.exp(-s))
    # x occupies lanes [0:I) of xc, aligned with m's real lanes; padding lanes
    # are sliced away by the wrapper.
    z_ref[...] = sig * xc + (1.0 - sig) * m
    # -log_sigmoid(s) = softplus(-s), numerically stable form
    nls_ref[...] = jnp.maximum(-s, 0.0) + jnp.log(1.0 + jnp.exp(-jnp.abs(s)))


# ----------------------------------------------------------------------------
# Parameter packing: fold masks + context weight + sigmoid_arg_bias, pad to
# lane-dense shapes. Done once at construction time.
# ----------------------------------------------------------------------------
def pack_iaf_params(params, masks, num_input, num_context, num_hidden):
    I, C, H = num_input, num_context, num_hidden
    to_np = lambda a: np.asarray(a, dtype=np.float32)

    w0 = np.zeros((LANE, LANE), np.float32)
    w0[:I, :H] = to_np(masks[0]) * to_np(params["w0"])      # fold mask0
    w0[I:I + C, :H] = to_np(params["wc"])                   # fuse context path
    b0 = np.zeros((1, LANE), np.float32)
    b0[0, :H] = to_np(params["b0"])

    w1 = np.zeros((LANE, LANE), np.float32)
    w1[:H, :H] = to_np(masks[1]) * to_np(params["w1"])      # fold mask1
    b1 = np.zeros((1, LANE), np.float32)
    b1[0, :H] = to_np(params["b1"])

    mw2 = to_np(masks[2]) * to_np(params["w2"])             # fold mask2, (H, 2I)
    w2 = np.zeros((LANE, 2 * LANE), np.float32)
    w2[:H, :I] = mw2[:, :I]                                 # m-half -> lanes [0:I)
    w2[:H, LANE:LANE + I] = mw2[:, I:]                      # s-half -> lanes [128:128+I)
    b2 = np.zeros((1, 2 * LANE), np.float32)
    b2[0, :I] = to_np(params["b2"])[:I]
    b2[0, LANE:LANE + I] = to_np(params["b2"])[I:] + to_np(params["sab"])  # fold sab

    return tuple(jnp.asarray(a) for a in (w0, b0, w1, b1, w2, b2))


# ----------------------------------------------------------------------------
# Wrapper: pads x/ctx into one [x, ctx] slab, runs the kernel over a batch
# grid with resident weights, slices the real lanes back out.
# ----------------------------------------------------------------------------
def iaf_forward(x, ctx, packed, *, num_input, tile_b=8):
    B, I = x.shape
    C = ctx.shape[1]
    Bp = ((B + tile_b - 1) // tile_b) * tile_b
    xc = jnp.pad(jnp.concatenate([x, ctx], axis=1).astype(jnp.float32),
                 ((0, Bp - B), (0, LANE - I - C)))

    w0, b0, w1, b1, w2, b2 = packed
    grid = (Bp // tile_b,)

    z_pad, nls_pad = pl.pallas_call(
        iaf_kernel,
        out_shape=(jax.ShapeDtypeStruct((Bp, LANE), jnp.float32),
                   jax.ShapeDtypeStruct((Bp, LANE), jnp.float32)),
        grid=grid,
        in_specs=[
            pl.BlockSpec((tile_b, LANE), lambda i: (i, 0)),      # xc (streamed)
            pl.BlockSpec((LANE, LANE), lambda i: (0, 0)),        # w0 (resident)
            pl.BlockSpec((1, LANE), lambda i: (0, 0)),           # b0
            pl.BlockSpec((LANE, LANE), lambda i: (0, 0)),        # w1
            pl.BlockSpec((1, LANE), lambda i: (0, 0)),           # b1
            pl.BlockSpec((LANE, 2 * LANE), lambda i: (0, 0)),    # w2
            pl.BlockSpec((1, 2 * LANE), lambda i: (0, 0)),       # b2
        ],
        out_specs=(pl.BlockSpec((tile_b, LANE), lambda i: (i, 0)),
                   pl.BlockSpec((tile_b, LANE), lambda i: (i, 0))),
        compiler_params=pltpu.CompilerParams(
            dimension_semantics=("parallel",)),
    )(xc, w0, b0, w1, b1, w2, b2)

    return z_pad[:B, :num_input], nls_pad[:B, :num_input]


# ----------------------------------------------------------------------------
# Pure-JAX reference (matches the PyTorch module semantics)
# ----------------------------------------------------------------------------
def iaf_reference(x, ctx, params, masks):
    h0 = x @ (masks[0] * params["w0"]) + params["b0"] + ctx @ params["wc"]
    h0 = jnp.maximum(h0, 0.0)
    h1 = jnp.maximum(h0 @ (masks[1] * params["w1"]) + params["b1"], 0.0)
    out = h1 @ (masks[2] * params["w2"]) + params["b2"]
    I = x.shape[1]
    m, s = out[:, :I], out[:, I:]
    s = s + params["sab"]
    sig = 1.0 / (1.0 + jnp.exp(-s))
    z = sig * x + (1.0 - sig) * m
    nls = jnp.maximum(-s, 0.0) + jnp.log(1.0 + jnp.exp(-jnp.abs(s)))
    return z, nls


if __name__ == "__main__":
    # Shapes consistent with InverseAutoregressiveFlow(num_input, num_hidden, num_context)
    num_input, num_hidden, num_context = 8, 32, 4
    num_output = 2 * num_input
    batch = 2

    masks_np = build_made_masks(num_input, num_output, num_hidden, num_layers=3)
    masks = [jnp.asarray(m) for m in masks_np]

    key = jax.random.PRNGKey(0)
    k = jax.random.split(key, 10)

    def init(kk, shape, fan_in):
        bound = 1.0 / np.sqrt(fan_in)
        return jax.random.uniform(kk, shape, jnp.float32, -bound, bound)

    params = {
        "w0": init(k[0], (num_input, num_hidden), num_input),
        "b0": init(k[1], (num_hidden,), num_input),
        "wc": init(k[2], (num_context, num_hidden), num_context),
        "w1": init(k[3], (num_hidden, num_hidden), num_hidden),
        "b1": init(k[4], (num_hidden,), num_hidden),
        "w2": init(k[5], (num_hidden, num_output), num_hidden),
        "b2": init(k[6], (num_output,), num_hidden),
        "sab": jnp.full((num_input,), 2.0, jnp.float32),  # sigmoid_arg_bias = ones*2
    }

    x = jax.random.normal(k[7], (batch, num_input), jnp.float32)
    ctx = jax.random.normal(k[8], (batch, num_context), jnp.float32)

    packed = pack_iaf_params(params, masks_np, num_input, num_context, num_hidden)

    z, nls = iaf_forward(x, ctx, packed, num_input=num_input)
    z = jax.block_until_ready(z)
    nls = jax.block_until_ready(nls)

    z_ref, nls_ref = iaf_reference(x, ctx, params, masks)
    np.testing.assert_allclose(np.asarray(z), np.asarray(z_ref), rtol=1e-5, atol=1e-5)
    np.testing.assert_allclose(np.asarray(nls), np.asarray(nls_ref), rtol=1e-5, atol=1e-5)

    assert z.shape == (batch, num_input) and nls.shape == (batch, num_input)
    print("KERNEL_OK")
</pallas_src>

<mosaic_0001>
module attributes {stable_mosaic.version = 11 : i64} {
  func.func @iaf_kernel(%arg0: i32, %arg1: memref<8x128xf32, #tpu.memory_space<vmem>>, %arg2: memref<128x128xf32, #tpu.memory_space<vmem>>, %arg3: memref<1x128xf32, #tpu.memory_space<vmem>>, %arg4: memref<128x128xf32, #tpu.memory_space<vmem>>, %arg5: memref<1x128xf32, #tpu.memory_space<vmem>>, %arg6: memref<128x256xf32, #tpu.memory_space<vmem>>, %arg7: memref<1x256xf32, #tpu.memory_space<vmem>>, %arg8: memref<8x128xf32, #tpu.memory_space<vmem>>, %arg9: memref<8x128xf32, #tpu.memory_space<vmem>>) attributes {dimension_semantics = [#tpu.dimension_semantics<parallel>], iteration_bounds = array<i64: 1>, scalar_prefetch = 0 : i64, scratch_operands = 0 : i64, tpu.core_type = #tpu.core_type<tc>, window_params = [{transform_indices = @transform_0, window_bounds = array<i64: 8, 128>}, {pipeline_mode = #tpu.pipeline_mode<synchronous>, transform_indices = @transform_1, window_bounds = array<i64: 128, 128>}, {pipeline_mode = #tpu.pipeline_mode<synchronous>, transform_indices = @transform_2, window_bounds = array<i64: 1, 128>}, {pipeline_mode = #tpu.pipeline_mode<synchronous>, transform_indices = @transform_3, window_bounds = array<i64: 128, 128>}, {pipeline_mode = #tpu.pipeline_mode<synchronous>, transform_indices = @transform_4, window_bounds = array<i64: 1, 128>}, {pipeline_mode = #tpu.pipeline_mode<synchronous>, transform_indices = @transform_5, window_bounds = array<i64: 128, 256>}, {pipeline_mode = #tpu.pipeline_mode<synchronous>, transform_indices = @transform_6, window_bounds = array<i64: 1, 256>}, {transform_indices = @transform_7, window_bounds = array<i64: 8, 128>}, {transform_indices = @transform_8, window_bounds = array<i64: 8, 128>}]} {
    %c0 = arith.constant 0 : index
    %c0_0 = arith.constant 0 : index
    %0 = vector.load %arg1[%c0, %c0_0] : memref<8x128xf32, #tpu.memory_space<vmem>>, vector<8x128xf32>
    %c0_1 = arith.constant 0 : index
    %c0_2 = arith.constant 0 : index
    %1 = vector.load %arg2[%c0_1, %c0_2] : memref<128x128xf32, #tpu.memory_space<vmem>>, vector<128x128xf32>
    %cst = arith.constant dense<0.000000e+00> : vector<8x128xf32>
    %2 = tpu.matmul %0, %1, %cst {dimension_numbers = #tpu.dot_dimension_numbers<[1], [0], [0], [1], [0, 0, 1, 1], [], []>} : vector<8x128xf32>, vector<128x128xf32>, vector<8x128xf32> -> vector<8x128xf32>
    %c0_3 = arith.constant 0 : index
    %c0_4 = arith.constant 0 : index
    %3 = vector.load %arg3[%c0_3, %c0_4] : memref<1x128xf32, #tpu.memory_space<vmem>>, vector<1x128xf32>
    %4 = vector.broadcast %3 : vector<1x128xf32> to vector<8x128xf32>
    %5 = arith.addf %2, %4 : vector<8x128xf32>
    %cst_5 = arith.constant 0.000000e+00 : f32
    %6 = vector.broadcast %cst_5 : f32 to vector<8x128xf32>
    %7 = arith.maximumf %5, %6 : vector<8x128xf32>
    %c0_6 = arith.constant 0 : index
    %c0_7 = arith.constant 0 : index
    %8 = vector.load %arg4[%c0_6, %c0_7] : memref<128x128xf32, #tpu.memory_space<vmem>>, vector<128x128xf32>
    %cst_8 = arith.constant dense<0.000000e+00> : vector<8x128xf32>
    %9 = tpu.matmul %7, %8, %cst_8 {dimension_numbers = #tpu.dot_dimension_numbers<[1], [0], [0], [1], [0, 0, 1, 1], [], []>} : vector<8x128xf32>, vector<128x128xf32>, vector<8x128xf32> -> vector<8x128xf32>
    %c0_9 = arith.constant 0 : index
    %c0_10 = arith.constant 0 : index
    %10 = vector.load %arg5[%c0_9, %c0_10] : memref<1x128xf32, #tpu.memory_space<vmem>>, vector<1x128xf32>
    %11 = vector.broadcast %10 : vector<1x128xf32> to vector<8x128xf32>
    %12 = arith.addf %9, %11 : vector<8x128xf32>
    %cst_11 = arith.constant 0.000000e+00 : f32
    %13 = vector.broadcast %cst_11 : f32 to vector<8x128xf32>
    %14 = arith.maximumf %12, %13 : vector<8x128xf32>
    %c0_12 = arith.constant 0 : index
    %c0_13 = arith.constant 0 : index
    %15 = vector.load %arg6[%c0_12, %c0_13] : memref<128x256xf32, #tpu.memory_space<vmem>>, vector<128x256xf32>
    %cst_14 = arith.constant dense<0.000000e+00> : vector<8x256xf32>
    %16 = tpu.matmul %14, %15, %cst_14 {dimension_numbers = #tpu.dot_dimension_numbers<[1], [0], [0], [1], [0, 0, 1, 1], [], []>} : vector<8x128xf32>, vector<128x256xf32>, vector<8x256xf32> -> vector<8x256xf32>
    %c0_15 = arith.constant 0 : index
    %c0_16 = arith.constant 0 : index
    %17 = vector.load %arg7[%c0_15, %c0_16] : memref<1x256xf32, #tpu.memory_space<vmem>>, vector<1x256xf32>
    %18 = vector.broadcast %17 : vector<1x256xf32> to vector<8x256xf32>
    %19 = arith.addf %16, %18 : vector<8x256xf32>
    %20 = vector.extract_strided_slice %19 {offsets = [0, 0], sizes = [8, 128], strides = [1, 1]} : vector<8x256xf32> to vector<8x128xf32>
    %21 = vector.extract_strided_slice %19 {offsets = [0, 128], sizes = [8, 128], strides = [1, 1]} : vector<8x256xf32> to vector<8x128xf32>
    %cst_17 = arith.constant 0.000000e+00 : f32
    %22 = vector.broadcast %cst_17 : f32 to vector<8x128xf32>
    %23 = arith.subf %22, %21 : vector<8x128xf32>
    %24 = math.exp %23 : vector<8x128xf32>
    %cst_18 = arith.constant 1.000000e+00 : f32
    %25 = vector.broadcast %cst_18 : f32 to vector<8x128xf32>
    %26 = arith.addf %25, %24 : vector<8x128xf32>
    %cst_19 = arith.constant 1.000000e+00 : f32
    %27 = vector.broadcast %cst_19 : f32 to vector<8x128xf32>
    %28 = arith.divf %27, %26 : vector<8x128xf32>
    %29 = arith.mulf %28, %0 : vector<8x128xf32>
    %cst_20 = arith.constant 1.000000e+00 : f32
    %30 = vector.broadcast %cst_20 : f32 to vector<8x128xf32>
    %31 = arith.subf %30, %28 : vector<8x128xf32>
    %32 = arith.mulf %31, %20 : vector<8x128xf32>
    %33 = arith.addf %29, %32 : vector<8x128xf32>
    %c0_21 = arith.constant 0 : index
    %c0_22 = arith.constant 0 : index
    %34 = vector.load %arg8[%c0_21, %c0_22] : memref<8x128xf32, #tpu.memory_space<vmem>>, vector<8x128xf32>
    tpu.vector_store %arg8[%c0_21, %c0_22], %33 {strides = array<i32>} : memref<8x128xf32, #tpu.memory_space<vmem>>, vector<8x128xf32>,
    %cst_23 = arith.constant 0.000000e+00 : f32
    %35 = vector.broadcast %cst_23 : f32 to vector<8x128xf32>
    %36 = arith.subf %35, %21 : vector<8x128xf32>
    %cst_24 = arith.constant 0.000000e+00 : f32
    %37 = vector.broadcast %cst_24 : f32 to vector<8x128xf32>
    %38 = arith.maximumf %36, %37 : vector<8x128xf32>
    %39 = math.absf %21 : vector<8x128xf32>
    %cst_25 = arith.constant 0.000000e+00 : f32
    %40 = vector.broadcast %cst_25 : f32 to vector<8x128xf32>
    %41 = arith.subf %40, %39 : vector<8x128xf32>
    %42 = math.exp %41 : vector<8x128xf32>
    %cst_26 = arith.constant 1.000000e+00 : f32
    %43 = vector.broadcast %cst_26 : f32 to vector<8x128xf32>
    %44 = arith.addf %43, %42 : vector<8x128xf32>
    %45 = math.log %44 : vector<8x128xf32>
    %46 = arith.addf %38, %45 : vector<8x128xf32>
    %c0_27 = arith.constant 0 : index
    %c0_28 = arith.constant 0 : index
    %47 = vector.load %arg9[%c0_27, %c0_28] : memref<8x128xf32, #tpu.memory_space<vmem>>, vector<8x128xf32>
    tpu.vector_store %arg9[%c0_27, %c0_28], %46 {strides = array<i32>} : memref<8x128xf32, #tpu.memory_space<vmem>>, vector<8x128xf32>,
    return
  }
  func.func @transform_0(%arg0: i32) -> (i32, i32) {
    %c0_i32 = arith.constant 0 : i32
    %c0_i32_0 = arith.constant 0 : i32
    return %arg0, %c0_i32 : i32, i32
  }
  func.func @transform_1(%arg0: i32) -> (i32, i32) {
    %c0_i32 = arith.constant 0 : i32
    %c0_i32_0 = arith.constant 0 : i32
    %c0_i32_1 = arith.constant 0 : i32
    return %c0_i32, %c0_i32_0 : i32, i32
  }
  func.func @transform_2(%arg0: i32) -> (i32, i32) {
    %c0_i32 = arith.constant 0 : i32
    %c0_i32_0 = arith.constant 0 : i32
    %c0_i32_1 = arith.constant 0 : i32
    return %c0_i32, %c0_i32_0 : i32, i32
  }
  func.func @transform_3(%arg0: i32) -> (i32, i32) {
    %c0_i32 = arith.constant 0 : i32
    %c0_i32_0 = arith.constant 0 : i32
    %c0_i32_1 = arith.constant 0 : i32
    return %c0_i32, %c0_i32_0 : i32, i32
  }
  func.func @transform_4(%arg0: i32) -> (i32, i32) {
    %c0_i32 = arith.constant 0 : i32
    %c0_i32_0 = arith.constant 0 : i32
    %c0_i32_1 = arith.constant 0 : i32
    return %c0_i32, %c0_i32_0 : i32, i32
  }
  func.func @transform_5(%arg0: i32) -> (i32, i32) {
    %c0_i32 = arith.constant 0 : i32
    %c0_i32_0 = arith.constant 0 : i32
    %c0_i32_1 = arith.constant 0 : i32
    return %c0_i32, %c0_i32_0 : i32, i32
  }
  func.func @transform_6(%arg0: i32) -> (i32, i32) {
    %c0_i32 = arith.constant 0 : i32
    %c0_i32_0 = arith.constant 0 : i32
    %c0_i32_1 = arith.constant 0 : i32
    return %c0_i32, %c0_i32_0 : i32, i32
  }
  func.func @transform_7(%arg0: i32) -> (i32, i32) {
    %c0_i32 = arith.constant 0 : i32
    %c0_i32_0 = arith.constant 0 : i32
    return %arg0, %c0_i32 : i32, i32
  }
  func.func @transform_8(%arg0: i32) -> (i32, i32) {
    %c0_i32 = arith.constant 0 : i32
    %c0_i32_0 = arith.constant 0 : i32
    return %arg0, %c0_i32 : i32, i32
  }
}

</mosaic_0001>

<llo_original>
// kernel: tpu_custom_call.1
$region0: #{tpu_custom_call.1}
  #allocation0 [shape = 'u32[]', space=smem, size = 0x4, offset = 0x4, fixed_abs, tag = 'smem constant byte address 0x4 - core index']
  #allocation1 [shape = 'u32[72,128]{1,0:T(1,128)}', space=vmem, size = 0x9000, scoped, tag = 'internal scratch']
  %s0 = inlined_call_operand.hbm [shape: f32[8,128], index: 0, kind: input, shape index: {}]
  %s1 = inlined_call_operand.hbm [shape: f32[128,128], index: 1, kind: input, shape index: {}]
  %s2 = inlined_call_operand.vmem [shape: f32[1,128], index: 2, kind: input, shape index: {}]
  %s3 = inlined_call_operand.hbm [shape: f32[128,128], index: 3, kind: input, shape index: {}]
  %s4 = inlined_call_operand.hbm [shape: f32[1,128], index: 4, kind: input, shape index: {}]
  %s5 = inlined_call_operand.hbm [shape: f32[128,256], index: 5, kind: input, shape index: {}]
  %s6 = inlined_call_operand.vmem [shape: f32[1,256], index: 6, kind: input, shape index: {}]
  %s7 = inlined_call_operand.hbm [shape: f32[8,128], index: 7, kind: output, shape index: {0}]
  %s8 = inlined_call_operand.hbm [shape: f32[8,128], index: 8, kind: output, shape index: {1}]
  %9 = xla_tuple %s7, %s8
  %s10 = sld [smem:[#allocation0]]
  $region66: #{tpu_custom_call.1} parent=0
    _
  %s12 = ssub.s32 1, %s10
  %s13 = scalar_select 0, %s12, %s10
  $region1: #{tpu_custom_call.1} parent=0
    #allocation2 [shape = 'u8[4096]{0}', space=vmem, size = 0x1000, scoped, tag = 'input window, operand 0, single buffered']
    #allocation3 [shape = 's32[1]{0}', space=sflag, size = 0x4, scoped, tag = 'scoped memory for tpu_custom_call.1']
    #allocation4 [shape = 's32[1]{0}', space=sflag, size = 0x4, scoped, tag = 'scoped memory for tpu_custom_call.1']
    #allocation5 [shape = 'u8[65536]{0}', space=vmem, size = 0x10000, scoped, tag = 'input window, operand 1, single buffered']
    #allocation6 [shape = 's32[1]{0}', space=sflag, size = 0x4, scoped, tag = 'scoped memory for tpu_custom_call.1']
    #allocation7 [shape = 'u8[65536]{0}', space=vmem, size = 0x10000, scoped, tag = 'input window, operand 3, single buffered']
    #allocation8 [shape = 'u8[512]{0}', space=vmem, size = 0x400, scoped, tag = 'input window, operand 4, single buffered']
    #allocation9 [shape = 's32[1]{0}', space=sflag, size = 0x4, scoped, tag = 'scoped memory for tpu_custom_call.1']
    #allocation10 [shape = 'u8[131072]{0}', space=vmem, size = 0x20000, scoped, tag = 'input window, operand 5, single buffered']
    #allocation11 [shape = 'u8[4096]{0}', space=vmem, size = 0x1000, scoped, tag = 'output window, operand 0, single buffered']
    #allocation12 [shape = 'u8[4096]{0}', space=vmem, size = 0x1000, scoped, tag = 'output window, operand 1, single buffered']
    #allocation13 [shape = 's32[1]{0}', space=sflag, size = 0x4, scoped, tag = 'scoped memory for tpu_custom_call.1']
    %14 = vsyncpa [#allocation3], 0
    %15 = vsyncpa [#allocation6], 0
    %16 = vsyncpa [#allocation9], 0
    %17 = vsyncpa [#allocation4], 0
    %18 = vsyncpa [#allocation13], 0
    // Predicated region
    $region2: #{tpu_custom_call.1} parent=1 // pred_check
      _
    $region3: #{tpu_custom_call.1} parent=1 // pred_check_branch
      %20 = sbr.rel (0) target = $region5
    $region4: #{tpu_custom_call.1} parent=1 // pred_region
      %22 = vsyncadd [#allocation3], 0
      %s24 = sshll.u32 %s0, 4
      %s25 = int_to_ptr.hbm [resolvable:$true] %s24
      %s26 = sshll.u32 [#allocation2], 4
      %s27 = int_to_ptr.vmem [resolvable:$true] %s26
      %29 = dma.hbm_to_vmem [thread:$0]  %s25, 128, %s27, [#allocation3]
    $region5: #{tpu_custom_call.1} parent=1 // pred_fallthru
      _
    // Predicated region
    $region6: #{tpu_custom_call.1} parent=1 // pred_check
      _
    $region7: #{tpu_custom_call.1} parent=1 // pred_check_branch
      %31 = sbr.rel (0) target = $region9
    $region8: #{tpu_custom_call.1} parent=1 // pred_region
      %33 = vsyncadd [#allocation6], 0
      %s34 = sshll.u32 %s1, 4
      %s35 = int_to_ptr.hbm [resolvable:$true] %s34
      %s36 = sshll.u32 [#allocation5], 4
      %s37 = int_to_ptr.vmem [resolvable:$true] %s36
      %42 = dma.hbm_to_vmem [thread:$0]  %s35, 2048, %s37, [#allocation6], 128, 128, 8
    $region9: #{tpu_custom_call.1} parent=1 // pred_fallthru
      _
    // Predicated region
    $region10: #{tpu_custom_call.1} parent=1 // pred_check
      _
    $region11: #{tpu_custom_call.1} parent=1 // pred_check_branch
      %44 = sbr.rel (0) target = $region13
    $region12: #{tpu_custom_call.1} parent=1 // pred_region
      _
    $region13: #{tpu_custom_call.1} parent=1 // pred_fallthru
      _
    // Predicated region
    $region14: #{tpu_custom_call.1} parent=1 // pred_check
      _
    $region15: #{tpu_custom_call.1} parent=1 // pred_check_branch
      %46 = sbr.rel (0) target = $region17
    $region16: #{tpu_custom_call.1} parent=1 // pred_region
      %48 = vsyncadd [#allocation6], 0
      %s49 = sshll.u32 %s3, 4
      %s50 = int_to_ptr.hbm [resolvable:$true] %s49
      %s51 = sshll.u32 [#allocation7], 4
      %s52 = int_to_ptr.vmem [resolvable:$true] %s51
      %57 = dma.hbm_to_vmem [thread:$0]  %s50, 2048, %s52, [#allocation6], 128, 128, 8
    $region17: #{tpu_custom_call.1} parent=1 // pred_fallthru
      _
    // Predicated region
    $region18: #{tpu_custom_call.1} parent=1 // pred_check
      _
    $region19: #{tpu_custom_call.1} parent=1 // pred_check_branch
      %59 = sbr.rel (0) target = $region21
    $region20: #{tpu_custom_call.1} parent=1 // pred_region
      %61 = vsyncadd [#allocation9], 0
      %s63 = sshll.u32 %s4, 4
      %s64 = int_to_ptr.hbm [resolvable:$true] %s63
      %s65 = sshll.u32 [#allocation8], 4
      %s66 = int_to_ptr.vmem [resolvable:$true] %s65
      %68 = dma.hbm_to_vmem [thread:$0]  %s64, 16, %s66, [#allocation9]
    $region21: #{tpu_custom_call.1} parent=1 // pred_fallthru
      _
    // Predicated region
    $region22: #{tpu_custom_call.1} parent=1 // pred_check
      _
    $region23: #{tpu_custom_call.1} parent=1 // pred_check_branch
      %70 = sbr.rel (0) target = $region25
    $region24: #{tpu_custom_call.1} parent=1 // pred_region
      %72 = vsyncadd [#allocation9], 0
      %s73 = sshll.u32 %s5, 4
      %s74 = int_to_ptr.hbm [resolvable:$true] %s73
      %s75 = sshll.u32 [#allocation10], 4
      %s76 = int_to_ptr.vmem [resolvable:$true] %s75
      %81 = dma.hbm_to_vmem [thread:$0]  %s74, 4096, %s76, [#allocation9], 256, 256, 16
    $region25: #{tpu_custom_call.1} parent=1 // pred_fallthru
      _
    // Predicated region
    $region26: #{tpu_custom_call.1} parent=1 // pred_check
      _
    $region27: #{tpu_custom_call.1} parent=1 // pred_check_branch
      %83 = sbr.rel (0) target = $region29
    $region28: #{tpu_custom_call.1} parent=1 // pred_region
      _
    $region29: #{tpu_custom_call.1} parent=1 // pred_fallthru
      _
    // Predicated region
    $region30: #{tpu_custom_call.1} parent=1 // pred_check
      _
    $region31: #{tpu_custom_call.1} parent=1 // pred_check_branch
      %85 = sbr.rel (0) target = $region33
    $region32: #{tpu_custom_call.1} parent=1 // pred_region
      %87 = dma.done [#allocation3], 128
    $region33: #{tpu_custom_call.1} parent=1 // pred_fallthru
      _
    // Predicated region
    $region34: #{tpu_custom_call.1} parent=1 // pred_check
      _
    $region35: #{tpu_custom_call.1} parent=1 // pred_check_branch
      %89 = sbr.rel (0) target = $region37
    $region36: #{tpu_custom_call.1} parent=1 // pred_region
      %91 = dma.done [#allocation6], 2048
    $region37: #{tpu_custom_call.1} parent=1 // pred_fallthru
      _
    // Predicated region
    $region38: #{tpu_custom_call.1} parent=1 // pred_check
      _
    $region39: #{tpu_custom_call.1} parent=1 // pred_check_branch
      %93 = sbr.rel (0) target = $region41
    $region40: #{tpu_custom_call.1} parent=1 // pred_region
      %95 = dma.done [#allocation6], 2048
    $region41: #{tpu_custom_call.1} parent=1 // pred_fallthru
      _
    // Predicated region
    $region42: #{tpu_custom_call.1} parent=1 // pred_check
      _
    $region43: #{tpu_custom_call.1} parent=1 // pred_check_branch
      %97 = sbr.rel (0) target = $region45
    $region44: #{tpu_custom_call.1} parent=1 // pred_region
      %99 = dma.done [#allocation9], 16
    $region45: #{tpu_custom_call.1} parent=1 // pred_fallthru
      _
    // Predicated region
    $region46: #{tpu_custom_call.1} parent=1 // pred_check
      _
    $region47: #{tpu_custom_call.1} parent=1 // pred_check_branch
      %101 = sbr.rel (0) target = $region49
    $region48: #{tpu_custom_call.1} parent=1 // pred_region
      %103 = dma.done [#allocation9], 4096
    $region49: #{tpu_custom_call.1} parent=1 // pred_fallthru
      _
    %v104 = vld [vmem:[#allocation2] sm:$0xff]
    %v105 = vld [vmem:[#allocation5] sm:$0xff]
    %v106 = vld [vmem:[#allocation5 + $0x8] sm:$0xff]
    %v107 = vld [vmem:[#allocation5 + $0x10] sm:$0xff]
    %v108 = vld [vmem:[#allocation5 + $0x18] sm:$0xff]
    %v109 = vld [vmem:[#allocation5 + $0x20] sm:$0xff]
    %v110 = vld [vmem:[#allocation5 + $0x28] sm:$0xff]
    %v111 = vld [vmem:[#allocation5 + $0x30] sm:$0xff]
    %v112 = vld [vmem:[#allocation5 + $0x38] sm:$0xff]
    %v113 = vld [vmem:[#allocation5 + $0x40] sm:$0xff]
    %v114 = vld [vmem:[#allocation5 + $0x48] sm:$0xff]
    %v115 = vld [vmem:[#allocation5 + $0x50] sm:$0xff]
    %v116 = vld [vmem:[#allocation5 + $0x58] sm:$0xff]
    %v117 = vld [vmem:[#allocation5 + $0x60] sm:$0xff]
    %v118 = vld [vmem:[#allocation5 + $0x68] sm:$0xff]
    %v119 = vld [vmem:[#allocation5 + $0x70] sm:$0xff]
    %v120 = vld [vmem:[#allocation5 + $0x78] sm:$0xff]
    %v121 = vld [vmem:[%s2] sm:$0x1]
    %v123 = vperm.slane %v121, 0
    %125 = vmatpush.msra.mxu0 %v120
    %126 = vmatpush.msra.mxu0 %v119
    %127 = vmatpush.msra.mxu0 %v118
    %128 = vmatpush.msra.mxu0 %v117
    %129 = vmatpush.msra.mxu0 %v116
    %130 = vmatpush.msra.mxu0 %v115
    %131 = vmatpush.msra.mxu0 %v114
    %132 = vmatpush.msra.mxu0 %v113
    %133 = vmatpush.msra.mxu0 %v112
    %134 = vmatpush.msra.mxu0 %v111
    %135 = vmatpush.msra.mxu0 %v110
    %136 = vmatpush.msra.mxu0 %v109
    %137 = vmatpush.msra.mxu0 %v108
    %138 = vmatpush.msra.mxu0 %v107
    %139 = vmatpush.msra.mxu0 %v106
    %140 = vmatpush.msra.mxu0 %v105
    %141 = vmatmul.f32.gmra.mxu0 %v104
    %v142 = vpop.f32.mrf.mxu0
    %v143 = vadd.f32 %v123, %v142
    %144 = vdwg.mxu0
    %v145 = vmax.f32 %v143, 0.0
    %v146 = vld [vmem:[#allocation7] sm:$0xff]
    %v147 = vld [vmem:[#allocation7 + $0x8] sm:$0xff]
    %v148 = vld [vmem:[#allocation7 + $0x10] sm:$0xff]
    %v149 = vld [vmem:[#allocation7 + $0x18] sm:$0xff]
    %v150 = vld [vmem:[#allocation7 + $0x20] sm:$0xff]
    %v151 = vld [vmem:[#allocation7 + $0x28] sm:$0xff]
    %v152 = vld [vmem:[#allocation7 + $0x30] sm:$0xff]
    %v153 = vld [vmem:[#allocation7 + $0x38] sm:$0xff]
    %v154 = vld [vmem:[#allocation7 + $0x40] sm:$0xff]
    %v155 = vld [vmem:[#allocation7 + $0x48] sm:$0xff]
    %v156 = vld [vmem:[#allocation7 + $0x50] sm:$0xff]
    %v157 = vld [vmem:[#allocation7 + $0x58] sm:$0xff]
    %v158 = vld [vmem:[#allocation7 + $0x60] sm:$0xff]
    %v159 = vld [vmem:[#allocation7 + $0x68] sm:$0xff]
    %v160 = vld [vmem:[#allocation7 + $0x70] sm:$0xff]
    %v161 = vld [vmem:[#allocation7 + $0x78] sm:$0xff]
    %v162 = vld [vmem:[#allocation8] sm:$0x1]
    %v164 = vperm.slane %v162, 0
    %166 = vmatpush.msra.mxu0 %v161
    %167 = vmatpush.msra.mxu0 %v160
    %168 = vmatpush.msra.mxu0 %v159
    %169 = vmatpush.msra.mxu0 %v158
    %170 = vmatpush.msra.mxu0 %v157
    %171 = vmatpush.msra.mxu0 %v156
    %172 = vmatpush.msra.mxu0 %v155
    %173 = vmatpush.msra.mxu0 %v154
    %174 = vmatpush.msra.mxu0 %v153
    %175 = vmatpush.msra.mxu0 %v152
    %176 = vmatpush.msra.mxu0 %v151
    %177 = vmatpush.msra.mxu0 %v150
    %178 = vmatpush.msra.mxu0 %v149
    %179 = vmatpush.msra.mxu0 %v148
    %180 = vmatpush.msra.mxu0 %v147
    %181 = vmatpush.msra.mxu0 %v146
    %182 = vmatmul.f32.gmra.mxu0 %v145
    %v183 = vpop.f32.mrf.mxu0
    %v184 = vadd.f32 %v164, %v183
    %185 = vdwg.mxu0
    %v186 = vmax.f32 %v184, 0.0
    %v187 = vld [vmem:[#allocation10] sm:$0xff]
    %v188 = vld [vmem:[#allocation10 + $0x8] sm:$0xff]
    %v189 = vld [vmem:[#allocation10 + $0x10] sm:$0xff]
    %v190 = vld [vmem:[#allocation10 + $0x18] sm:$0xff]
    %v191 = vld [vmem:[#allocation10 + $0x20] sm:$0xff]
    %v192 = vld [vmem:[#allocation10 + $0x28] sm:$0xff]
    %v193 = vld [vmem:[#allocation10 + $0x30] sm:$0xff]
    %v194 = vld [vmem:[#allocation10 + $0x38] sm:$0xff]
    %v195 = vld [vmem:[#allocation10 + $0x40] sm:$0xff]
    %v196 = vld [vmem:[#allocation10 + $0x48] sm:$0xff]
    %v197 = vld [vmem:[#allocation10 + $0x50] sm:$0xff]
    %v198 = vld [vmem:[#allocation10 + $0x58] sm:$0xff]
    %v199 = vld [vmem:[#allocation10 + $0x60] sm:$0xff]
    %v200 = vld [vmem:[#allocation10 + $0x68] sm:$0xff]
    %v201 = vld [vmem:[#allocation10 + $0x70] sm:$0xff]
    %v202 = vld [vmem:[#allocation10 + $0x78] sm:$0xff]
    %v203 = vld [vmem:[#allocation10 + $0x80] sm:$0xff]
    %v204 = vld [vmem:[#allocation10 + $0x88] sm:$0xff]
    %v205 = vld [vmem:[#allocation10 + $0x90] sm:$0xff]
    %v206 = vld [vmem:[#allocation10 + $0x98] sm:$0xff]
    %v207 = vld [vmem:[#allocation10 + $0xa0] sm:$0xff]
    %v208 = vld [vmem:[#allocation10 + $0xa8] sm:$0xff]
    %v209 = vld [vmem:[#allocation10 + $0xb0] sm:$0xff]
    %v210 = vld [vmem:[#allocation10 + $0xb8] sm:$0xff]
    %v211 = vld [vmem:[#allocation10 + $0xc0] sm:$0xff]
    %v212 = vld [vmem:[#allocation10 + $0xc8] sm:$0xff]
    %v213 = vld [vmem:[#allocation10 + $0xd0] sm:$0xff]
    %v214 = vld [vmem:[#allocation10 + $0xd8] sm:$0xff]
    %v215 = vld [vmem:[#allocation10 + $0xe0] sm:$0xff]
    %v216 = vld [vmem:[#allocation10 + $0xe8] sm:$0xff]
    %v217 = vld [vmem:[#allocation10 + $0xf0] sm:$0xff]
    %v218 = vld [vmem:[#allocation10 + $0xf8] sm:$0xff]
    %v219 = vld [vmem:[%s6] sm:$0x3]
    %v221 = vperm.slane %v219, 0
    %v222 = vperm.slane %v219, 1
    %225 = vmatpush.msra.mxu0 %v217
    %226 = vmatpush.msra.mxu0 %v215
    %227 = vmatpush.msra.mxu0 %v213
    %228 = vmatpush.msra.mxu0 %v211
    %229 = vmatpush.msra.mxu0 %v209
    %230 = vmatpush.msra.mxu0 %v207
    %231 = vmatpush.msra.mxu0 %v205
    %232 = vmatpush.msra.mxu0 %v203
    %233 = vmatpush.msra.mxu0 %v201
    %234 = vmatpush.msra.mxu0 %v199
    %235 = vmatpush.msra.mxu0 %v197
    %236 = vmatpush.msra.mxu0 %v195
    %237 = vmatpush.msra.mxu0 %v193
    %238 = vmatpush.msra.mxu0 %v191
    %239 = vmatpush.msra.mxu0 %v189
    %240 = vmatpush.msra.mxu0 %v187
    %241 = vmatmul.f32.gmra.mxu0 %v186
    %v242 = vpop.f32.mrf.mxu0
    %v243 = vadd.f32 %v221, %v242
    %244 = vdwg.mxu0
    %245 = vmatpush.msra.mxu0 %v218
    %246 = vmatpush.msra.mxu0 %v216
    %247 = vmatpush.msra.mxu0 %v214
    %248 = vmatpush.msra.mxu0 %v212
    %249 = vmatpush.msra.mxu0 %v210
    %250 = vmatpush.msra.mxu0 %v208
    %251 = vmatpush.msra.mxu0 %v206
    %252 = vmatpush.msra.mxu0 %v204
    %253 = vmatpush.msra.mxu0 %v202
    %254 = vmatpush.msra.mxu0 %v200
    %255 = vmatpush.msra.mxu0 %v198
    %256 = vmatpush.msra.mxu0 %v196
    %257 = vmatpush.msra.mxu0 %v194
    %258 = vmatpush.msra.mxu0 %v192
    %259 = vmatpush.msra.mxu0 %v190
    %260 = vmatpush.msra.mxu0 %v188
    %261 = vmatmul.f32.gmra.mxu0 %v186
    %v262 = vpop.f32.mrf.mxu0
    %v263 = vadd.f32 %v222, %v262
    %264 = vdwg.mxu0
    %v265 = vsub.f32 0.0, %v263
    %v266 = vmul.f32 %v265, 1.442695
    %v267 = vpow.pop %v266
    %v268 = vadd.f32 %v267, 1.0
    %v269 = vrcp.pop %v268
    %v270 = vmul.f32 %v268, %v269
    %v271 = vsub.f32 1.0, %v270
    %v272 = vmul.f32 %v269, %v271
    %v273 = vadd.f32 %v269, %v272
    %vm274 = vweird.f32 %v268
    %vm275 = vweird.f32 %v269
    %vm276 = vmor %vm274, %vm275
    %v277 = vsel %vm276, %v269, %v273
    %v278 = vand.u32 2147483647, %v268
    %vm279 = vcmp.eq.f32.partialorder %v278, 8.507059e+37
    %v280 = vand.u32 %v268, 2147483648
    %v281 = vor.u32 1.1754944e-38, %v280
    %v282 = vsel %vm279, %v281, %v277
    %v283 = vmul.f32 1.0, %v282
    %v284 = vmul.f32 %v283, %v104
    %v285 = vsub.f32 1.0, %v283
    %v286 = vmul.f32 %v285, %v243
    %v287 = vadd.f32 %v284, %v286
    %288 = vst [vmem:[#allocation11] sm:$0xff] %v287
    %v289 = vmax.f32 %v265, 0.0
    %v290 = vand.u32 2147483647, %v263
    %v291 = vsub.f32 0.0, %v290
    %v292 = vmul.f32 %v291, 1.442695
    %v293 = vpow.pop %v292
    %v294 = vadd.f32 %v293, 1.0
    %v295 = vlog2.pop %v294
    %v296 = vmul.f32 %v295, 0.6931472
    %v297 = vadd.f32 %v289, %v296
    %298 = vst [vmem:[#allocation12] sm:$0xff] %v297
    // Predicated region
    $region50: #{tpu_custom_call.1} parent=1 // pred_check
      _
    $region51: #{tpu_custom_call.1} parent=1 // pred_check_branch
      %300 = sbr.rel (0) target = $region53
    $region52: #{tpu_custom_call.1} parent=1 // pred_region
      %302 = vsyncadd [#allocation4], 0
      %s304 = sshll.u32 [#allocation11], 4
      %s305 = int_to_ptr.vmem [resolvable:$true] %s304
      %s306 = sshll.u32 %s7, 4
      %s307 = int_to_ptr.hbm [resolvable:$true] %s306
      %309 = dma.vmem_to_hbm [thread:$0]  %s305, 128, %s307, [#allocation4]
    $region53: #{tpu_custom_call.1} parent=1 // pred_fallthru
      _
    // Predicated region
    $region54: #{tpu_custom_call.1} parent=1 // pred_check
      _
    $region55: #{tpu_custom_call.1} parent=1 // pred_check_branch
      %311 = sbr.rel (0) target = $region57
    $region56: #{tpu_custom_call.1} parent=1 // pred_region
      %313 = vsyncadd [#allocation13], 0
      %s315 = sshll.u32 [#allocation12], 4
      %s316 = int_to_ptr.vmem [resolvable:$true] %s315
      %s317 = sshll.u32 %s8, 4
      %s318 = int_to_ptr.hbm [resolvable:$true] %s317
      %320 = dma.vmem_to_hbm [thread:$0]  %s316, 128, %s318, [#allocation13]
    $region57: #{tpu_custom_call.1} parent=1 // pred_fallthru
      _
    // Predicated region
    $region58: #{tpu_custom_call.1} parent=1 // pred_check
      _
    $region59: #{tpu_custom_call.1} parent=1 // pred_check_branch
      %322 = sbr.rel (0) target = $region61
    $region60: #{tpu_custom_call.1} parent=1 // pred_region
      %324 = dma.done [#allocation4], 128
    $region61: #{tpu_custom_call.1} parent=1 // pred_fallthru
      _
    // Predicated region
    $region62: #{tpu_custom_call.1} parent=1 // pred_check
      _
    $region63: #{tpu_custom_call.1} parent=1 // pred_check_branch
      %326 = sbr.rel (0) target = $region65
    $region64: #{tpu_custom_call.1} parent=1 // pred_region
      %328 = dma.done [#allocation13], 128
    $region65: #{tpu_custom_call.1} parent=1 // pred_fallthru
      _
    %329 = vsyncpa [#allocation3], 1
    %330 = vsyncpa [#allocation6], 1
    %331 = vsyncpa [#allocation9], 1
    %332 = vsyncpa [#allocation4], 1
    %333 = vsyncpa [#allocation13], 1

</llo_original>
